<compile_context>
chip_gen: v5e
topology: v5e:2x2
jax: 0.10.0
libtpu: 0.0.40
codegen_flags: <defaults>
</compile_context>

<pallas_src>
import math

import jax
import jax.numpy as jnp
from jax import lax
from jax.experimental import pallas as pl
from jax.experimental.pallas import tpu as pltpu


def _linear_kernel_t(z_ref, w_ref, b_ref, o_ref):
    # z_ref: (TB, D), w_ref: (Y, D), b_ref: (Y, 1), o_ref: (Y, TB)
    # Contract both operands on the D axis (dim 1 of each) -> (Y, TB).
    # No transpose: MXU is fed directly, f32 accumulation, lane-dense store.
    acc = lax.dot_general(
        w_ref[...], z_ref[...],
        dimension_numbers=(((1,), (1,)), ((), ())),
        preferred_element_type=jnp.float32,
    )
    o_ref[...] = (acc + b_ref[...].astype(jnp.float32)).astype(o_ref.dtype)


def _vmem_capacity_bytes() -> int:
    """Physical VMEM per TensorCore (generation-aware), with a safe fallback."""
    try:
        cap = int(pltpu.get_tpu_info().vmem_capacity_bytes)
        if cap > 0:
            return cap
    except Exception:
        pass
    return 64 * 1024 * 1024  # conservative (v7x-sized) fallback


def _choose_batch_tile(B: int, D: int, itemsize: int, budget_bytes: int) -> int:
    """Rows per z tile: ~1-4 MiB of z per tile, >=2 grid steps when possible."""
    row_bytes = D * itemsize
    # 1-4 MiB z tiles sit on the measured HBM-roofline plateau; stay inside
    # the per-generation VMEM budget (double-buffered by the pipeline).
    target = min(4 << 20, max(1 << 20, budget_bytes // 4))
    tb = max(128, (target // row_bytes) // 128 * 128)
    # Guarantee >=2 grid steps for large B so both v7x TCs run ("parallel" axis).
    if B >= 2 * 128:
        half = -(-B // 2)             # ceil(B/2)
        half = -(-half // 128) * 128  # round up to a multiple of 128
        tb = min(tb, half)
    if tb >= B:
        return B  # single full-batch tile (block dims == array dims: always legal)
    # tb < B: must be a multiple of 8 for the z sublane dim and a multiple of
    # 128 for the lane-dense (Y, tb) output block -> multiple of 128.
    return tb


def linear_regr(z: jax.Array, weight: jax.Array, bias: jax.Array,
                *, force_pallas: bool = False) -> jax.Array:
    """y_hat = z @ weight.T + bias  (matches nn.Linear forward). Output (B, Y)."""
    B, D = z.shape
    Y, D2 = weight.shape
    assert D == D2, f"latent_dim mismatch: {D} vs {D2}"
    assert bias.shape == (Y,)

    itemsize = jnp.dtype(z.dtype).itemsize

    # Small-problem fast path: at tiny shapes (the module's real use case) a
    # standalone pallas_call is pure launch/DMA overhead; let XLA fuse it.
    if not force_pallas and B * D * itemsize < (256 << 10):
        return (z @ weight.T + bias).astype(z.dtype)

    cap = _vmem_capacity_bytes()
    budget = (cap * 3) // 8  # ~24 MiB on v7x, ~48 MiB on v5e/v6e

    tb = _choose_batch_tile(B, D, itemsize, budget)
    grid = (pl.cdiv(B, tb),)

    b2d = bias.reshape(Y, 1)

    # VMEM actually used by the pipeline buffers (+2x headroom, generation-capped).
    buf_bytes = (2 * tb * D + 2 * Y * tb + 2 * Y * D + 2 * Y) * itemsize
    vmem_limit = int(min(cap // 2, max(16 << 20, 2 * buf_bytes)))

    cost = pl.CostEstimate(
        flops=2 * B * D * Y,
        transcendentals=0,
        bytes_accessed=(B * D + Y * D + Y + B * Y) * itemsize,
    )

    out_t = pl.pallas_call(
        _linear_kernel_t,
        out_shape=jax.ShapeDtypeStruct((Y, B), z.dtype),
        grid=grid,
        in_specs=[
            pl.BlockSpec((tb, D), lambda i: (i, 0)),   # z: stream row tiles
            pl.BlockSpec((Y, D), lambda i: (0, 0)),    # weight: resident in VMEM
            pl.BlockSpec((Y, 1), lambda i: (0, 0)),    # bias: resident in VMEM
        ],
        out_specs=pl.BlockSpec((Y, tb), lambda i: (0, i)),  # lane-dense (Y, tb)
        compiler_params=pltpu.CompilerParams(
            dimension_semantics=("parallel",),
            vmem_limit_bytes=vmem_limit,
        ),
        cost_estimate=cost,
    )(z, weight, b2d)

    return jnp.transpose(out_t)  # (B, Y), matching nn.Linear


if __name__ == "__main__":
    # Small shapes consistent with the module: latent_dim=32, y_dim=2, batch=8.
    latent_dim, y_dim, batch = 32, 2, 8

    key = jax.random.PRNGKey(0)
    k_z, k_w, k_b, k_z2 = jax.random.split(key, 4)

    # nn.Linear default init: U(-1/sqrt(fan_in), +1/sqrt(fan_in)).
    bound = 1.0 / math.sqrt(latent_dim)
    weight = jax.random.uniform(k_w, (y_dim, latent_dim), jnp.float32, -bound, bound)
    bias = jax.random.uniform(k_b, (y_dim,), jnp.float32, -bound, bound)
    z = jax.random.normal(k_z, (batch, latent_dim), jnp.float32)

    # 1) Default path at the module's toy shape (fast path / XLA fusion).
    y_small = linear_regr(z, weight, bias)
    # 2) Force the Pallas kernel at the same tiny shape (single-tile path).
    y_small_pl = linear_regr(z, weight, bias, force_pallas=True)
    # 3) Larger batch exercising the byte-budgeted tiling / lane-dense store /
    #    >=2 "parallel" grid steps (both v7x TensorCores).
    big_b = 2048
    z_big = jax.random.normal(k_z2, (big_b, latent_dim), jnp.float32)
    y_big = linear_regr(z_big, weight, bias, force_pallas=True)

    jax.block_until_ready((y_small, y_small_pl, y_big))

    # Correctness checks against plain JAX references.
    ref_small = z @ weight.T + bias
    ref_big = z_big @ weight.T + bias
    assert y_small.shape == (batch, y_dim)
    assert y_small_pl.shape == (batch, y_dim)
    assert y_big.shape == (big_b, y_dim)
    assert jnp.allclose(y_small, ref_small, atol=1e-5, rtol=1e-5), "fast-path mismatch"
    assert jnp.allclose(y_small_pl, ref_small, atol=1e-5, rtol=1e-5), "pallas small mismatch"
    assert jnp.allclose(y_big, ref_big, atol=1e-5, rtol=1e-5), "pallas tiled mismatch"

    print("KERNEL_OK")
</pallas_src>

<mosaic_0001>
module attributes {stable_mosaic.version = 11 : i64} {
  func.func @_linear_kernel_t(%arg0: i32, %arg1: memref<8x32xf32, #tpu.memory_space<vmem>>, %arg2: memref<2x32xf32, #tpu.memory_space<vmem>>, %arg3: memref<2x1xf32, #tpu.memory_space<vmem>>, %arg4: memref<2x8xf32, #tpu.memory_space<vmem>>) attributes {dimension_semantics = [#tpu.dimension_semantics<parallel>], iteration_bounds = array<i64: 1>, scalar_prefetch = 0 : i64, scratch_operands = 0 : i64, tpu.core_type = #tpu.core_type<tc>, window_params = [{transform_indices = @transform_0, window_bounds = array<i64: 8, 32>}, {pipeline_mode = #tpu.pipeline_mode<synchronous>, transform_indices = @transform_1, window_bounds = array<i64: 2, 32>}, {pipeline_mode = #tpu.pipeline_mode<synchronous>, transform_indices = @transform_2, window_bounds = array<i64: 2, 1>}, {transform_indices = @transform_3, window_bounds = array<i64: 2, 8>}]} {
    %c0 = arith.constant 0 : index
    %c0_0 = arith.constant 0 : index
    %0 = vector.load %arg2[%c0, %c0_0] : memref<2x32xf32, #tpu.memory_space<vmem>>, vector<2x32xf32>
    %c0_1 = arith.constant 0 : index
    %c0_2 = arith.constant 0 : index
    %1 = vector.load %arg1[%c0_1, %c0_2] : memref<8x32xf32, #tpu.memory_space<vmem>>, vector<8x32xf32>
    %cst = arith.constant dense<0.000000e+00> : vector<2x8xf32>
    %2 = tpu.matmul %0, %1, %cst {dimension_numbers = #tpu.dot_dimension_numbers<[1], [1], [0], [0], [0, 0, 1, 0], [], []>} : vector<2x32xf32>, vector<8x32xf32>, vector<2x8xf32> -> vector<2x8xf32>
    %c0_3 = arith.constant 0 : index
    %c0_4 = arith.constant 0 : index
    %3 = vector.load %arg3[%c0_3, %c0_4] : memref<2x1xf32, #tpu.memory_space<vmem>>, vector<2x1xf32>
    %4 = vector.broadcast %3 : vector<2x1xf32> to vector<2x8xf32>
    %5 = arith.addf %2, %4 : vector<2x8xf32>
    %c0_5 = arith.constant 0 : index
    %c0_6 = arith.constant 0 : index
    %6 = vector.load %arg4[%c0_5, %c0_6] : memref<2x8xf32, #tpu.memory_space<vmem>>, vector<2x8xf32>
    tpu.vector_store %arg4[%c0_5, %c0_6], %5 {strides = array<i32>} : memref<2x8xf32, #tpu.memory_space<vmem>>, vector<2x8xf32>,
    return
  }
  func.func @transform_0(%arg0: i32) -> (i32, i32) {
    %c0_i32 = arith.constant 0 : i32
    %c0_i32_0 = arith.constant 0 : i32
    return %arg0, %c0_i32 : i32, i32
  }
  func.func @transform_1(%arg0: i32) -> (i32, i32) {
    %c0_i32 = arith.constant 0 : i32
    %c0_i32_0 = arith.constant 0 : i32
    %c0_i32_1 = arith.constant 0 : i32
    return %c0_i32, %c0_i32_0 : i32, i32
  }
  func.func @transform_2(%arg0: i32) -> (i32, i32) {
    %c0_i32 = arith.constant 0 : i32
    %c0_i32_0 = arith.constant 0 : i32
    %c0_i32_1 = arith.constant 0 : i32
    return %c0_i32, %c0_i32_0 : i32, i32
  }
  func.func @transform_3(%arg0: i32) -> (i32, i32) {
    %c0_i32 = arith.constant 0 : i32
    %c0_i32_0 = arith.constant 0 : i32
    return %c0_i32, %arg0 : i32, i32
  }
}

</mosaic_0001>

<llo_original>
// kernel: tpu_custom_call.1
$region0: #{tpu_custom_call.1}
  #allocation0 [shape = 'u32[]', space=smem, size = 0x4, offset = 0x4, fixed_abs, tag = 'smem constant byte address 0x4 - core index']
  #allocation1 [shape = 'u32[72,128]{1,0:T(1,128)}', space=vmem, size = 0x9000, scoped, tag = 'internal scratch']
  %s0 = inlined_call_operand.hbm [shape: f32[8,32], index: 0, kind: input, shape index: {}]
  %s1 = inlined_call_operand.vmem [shape: f32[2,32], index: 1, kind: input, shape index: {}]
  %s2 = inlined_call_operand.vmem [shape: f32[2,1], index: 2, kind: input, shape index: {}]
  %s3 = inlined_call_operand.hbm [shape: f32[2,8], index: 3, kind: output, shape index: {}]
  %s4 = sld [smem:[#allocation0]]
  $region26: #{tpu_custom_call.1} parent=0
    _
  %s6 = ssub.s32 1, %s4
  %s7 = scalar_select 0, %s6, %s4
  $region1: #{tpu_custom_call.1} parent=0
    #allocation2 [shape = 'u8[4096]{0}', space=vmem, size = 0x1000, scoped, tag = 'input window, operand 0, single buffered']
    #allocation3 [shape = 's32[1]{0}', space=sflag, size = 0x4, scoped, tag = 'scoped memory for tpu_custom_call.1']
    #allocation4 [shape = 's32[1]{0}', space=sflag, size = 0x4, scoped, tag = 'scoped memory for tpu_custom_call.1']
    #allocation5 [shape = 'u8[1024]{0}', space=vmem, size = 0x400, scoped, tag = 'output window, operand 0, single buffered']
    %8 = vsyncpa [#allocation3], 0
    %9 = vsyncpa [#allocation4], 0
    // Predicated region
    $region2: #{tpu_custom_call.1} parent=1 // pred_check
      _
    $region3: #{tpu_custom_call.1} parent=1 // pred_check_branch
      %11 = sbr.rel (0) target = $region5
    $region4: #{tpu_custom_call.1} parent=1 // pred_region
      %13 = vsyncadd [#allocation3], 0
      %s15 = sshll.u32 %s0, 4
      %s16 = int_to_ptr.hbm [resolvable:$true] %s15
      %s17 = sshll.u32 [#allocation2], 4
      %s18 = int_to_ptr.vmem [resolvable:$true] %s17
      %20 = dma.hbm_to_vmem [thread:$0]  %s16, 128, %s18, [#allocation3]
    $region5: #{tpu_custom_call.1} parent=1 // pred_fallthru
      _
    // Predicated region
    $region6: #{tpu_custom_call.1} parent=1 // pred_check
      _
    $region7: #{tpu_custom_call.1} parent=1 // pred_check_branch
      %22 = sbr.rel (0) target = $region9
    $region8: #{tpu_custom_call.1} parent=1 // pred_region
      _
    $region9: #{tpu_custom_call.1} parent=1 // pred_fallthru
      _
    // Predicated region
    $region10: #{tpu_custom_call.1} parent=1 // pred_check
      _
    $region11: #{tpu_custom_call.1} parent=1 // pred_check_branch
      %24 = sbr.rel (0) target = $region13
    $region12: #{tpu_custom_call.1} parent=1 // pred_region
      _
    $region13: #{tpu_custom_call.1} parent=1 // pred_fallthru
      _
    // Predicated region
    $region14: #{tpu_custom_call.1} parent=1 // pred_check
      _
    $region15: #{tpu_custom_call.1} parent=1 // pred_check_branch
      %26 = sbr.rel (0) target = $region17
    $region16: #{tpu_custom_call.1} parent=1 // pred_region
      %28 = dma.done [#allocation3], 128
    $region17: #{tpu_custom_call.1} parent=1 // pred_fallthru
      _
    %v29 = vld [vmem:[%s1] sm:$0x3]
    %v30 = vld [vmem:[#allocation2] sm:$0xff]
    %v31 = vld [vmem:[%s2] sm:$0x3]
    %33 = vset.pattern.permute.xlu0 0
    %34 = vperm.xlu0 %33, %v31
    %v35 = vpop.permute.xlu0 %34
    %vm37 = vcmask 261120
    %v39 = vsel %vm37, %v29, 0
    %v42 = vsel %vm37, %v30, 0
    %44 = vmatpush.xpose.msra.mxu0 0.0
    %45 = vmatpush.xpose.msra.mxu0 0.0
    %46 = vmatpush.xpose.msra.mxu0 0.0
    %47 = vmatpush.xpose.msra.mxu0 0.0
    %48 = vmatpush.xpose.msra.mxu0 0.0
    %49 = vmatpush.xpose.msra.mxu0 0.0
    %50 = vmatpush.xpose.msra.mxu0 0.0
    %51 = vmatpush.xpose.msra.mxu0 0.0
    %52 = vmatpush.xpose.msra.mxu0 0.0
    %53 = vmatpush.xpose.msra.mxu0 0.0
    %54 = vmatpush.xpose.msra.mxu0 0.0
    %55 = vmatpush.xpose.msra.mxu0 0.0
    %56 = vmatpush.xpose.msra.mxu0 0.0
    %57 = vmatpush.xpose.msra.mxu0 0.0
    %58 = vmatpush.xpose.msra.mxu0 0.0
    %59 = vmatpush.xpose.msra.mxu0 %v42
    %60 = vmatmul.f32.gmra.mxu0 %v39
    %v61 = vpop.f32.mrf.mxu0
    %v62 = vadd.f32 %v35, %v61
    %63 = vdwg.mxu0
    %vm64 = vcmask 58368
    %65 = vst.msk [vmem:[#allocation5] sm:$0x3] %vm64, %v62
    // Predicated region
    $region18: #{tpu_custom_call.1} parent=1 // pred_check
      _
    $region19: #{tpu_custom_call.1} parent=1 // pred_check_branch
      %67 = sbr.rel (0) target = $region21
    $region20: #{tpu_custom_call.1} parent=1 // pred_region
      %69 = vsyncadd [#allocation4], 0
      %s71 = sshll.u32 [#allocation5], 4
      %s72 = int_to_ptr.vmem [resolvable:$true] %s71
      %s73 = sshll.u32 %s3, 4
      %s74 = int_to_ptr.hbm [resolvable:$true] %s73
      %76 = dma.vmem_to_hbm [thread:$0]  %s72, 32, %s74, [#allocation4]
    $region21: #{tpu_custom_call.1} parent=1 // pred_fallthru
      _
    // Predicated region
    $region22: #{tpu_custom_call.1} parent=1 // pred_check
      _
    $region23: #{tpu_custom_call.1} parent=1 // pred_check_branch
      %78 = sbr.rel (0) target = $region25
    $region24: #{tpu_custom_call.1} parent=1 // pred_region
      %80 = dma.done [#allocation4], 32
    $region25: #{tpu_custom_call.1} parent=1 // pred_fallthru
      _
    %81 = vsyncpa [#allocation3], 1
    %82 = vsyncpa [#allocation4], 1

</llo_original>
